<compile_context>
chip_gen: v7x
topology: tpu7x:2x2x1
jax: 0.10.0
libtpu: 0.0.40
codegen_flags: <defaults>
</compile_context>

<pallas_src>
import functools

import jax
import jax.numpy as jnp
from jax import lax
from jax.experimental import pallas as pl
from jax.experimental.pallas import tpu as pltpu

_LANE = 128
# Minimum sublane multiple for the block's second-to-last dim, per itemsize.
_SUBLANE_MULT = {4: 8, 2: 16, 1: 32}
# Per-buffer block target (~6 MiB): 2 input + 2 output double-buffers = 24 MiB.
_TARGET_BLOCK_BYTES = 6 * 1024 * 1024
# Below this total size a single full-extent block is fine (pipelining buys nothing).
_SINGLE_BLOCK_BYTES = 1 * 1024 * 1024
# For anything bigger, guarantee >= 4 grid steps (DMA/compute overlap, v7x 2 TCs).
_MIN_GRID_STEPS = 4
# Explicit scoped-VMEM budget (safe on v5e/v6e/v7x; v7x physical VMEM is 64 MiB).
_VMEM_LIMIT_BYTES = 40 * 1024 * 1024


def _activation_kernel(x_ref, o_ref, *, act_type):
    x = x_ref[...]
    if act_type == "square":
        o_ref[...] = x * x
    else:  # "log"
        # torch.log(torch.clamp(input, min=1e-06)); NaN propagates like torch.clamp.
        o_ref[...] = jnp.log(jnp.maximum(x, jnp.asarray(1e-6, x.dtype)))


def _elementwise_jnp(x, act_type):
    if act_type == "square":
        return x * x
    return jnp.log(jnp.maximum(x, jnp.asarray(1e-6, x.dtype)))


def _choose_block_rows(rows, itemsize):
    """Byte-sized block selection with a minimum number of grid steps."""
    sub = _SUBLANE_MULT.get(itemsize, 8)
    total_bytes = rows * _LANE * itemsize
    if total_bytes <= _SINGLE_BLOCK_BYTES:
        return rows  # single full-extent block (always legal)
    # Target ~_TARGET_BLOCK_BYTES per buffer, rounded down to the sublane multiple.
    target = max(sub, (_TARGET_BLOCK_BYTES // (_LANE * itemsize)) // sub * sub)
    # Cap so we get at least _MIN_GRID_STEPS pipelined blocks.
    cap = max(sub, (-(-rows // _MIN_GRID_STEPS)) // sub * sub)
    return min(target, cap)


def _run_kernel_2d(x2d, act_type, block_rows):
    rows = x2d.shape[0]
    itemsize = jnp.dtype(x2d.dtype).itemsize
    n = rows * _LANE
    grid = (pl.cdiv(rows, block_rows),)

    cost = pl.CostEstimate(
        flops=n if act_type == "square" else 0,
        transcendentals=n if act_type == "log" else 0,
        bytes_accessed=2 * n * itemsize,
    )
    kernel = functools.partial(_activation_kernel, act_type=act_type)

    return pl.pallas_call(
        kernel,
        out_shape=jax.ShapeDtypeStruct((rows, _LANE), x2d.dtype),
        grid_spec=pltpu.PrefetchScalarGridSpec(
            num_scalar_prefetch=0,
            grid=grid,
            in_specs=[pl.BlockSpec((block_rows, _LANE), lambda i: (i, 0))],
            out_specs=pl.BlockSpec((block_rows, _LANE), lambda i: (i, 0)),
        ),
        compiler_params=pltpu.CompilerParams(
            dimension_semantics=("parallel",),
            vmem_limit_bytes=_VMEM_LIMIT_BYTES,
        ),
        cost_estimate=cost,
    )(x2d)


def activation(x, act_type, *, block_rows=None):
    """Elementwise activation matching the PyTorch Activation module."""
    if act_type not in ("square", "log"):
        raise Exception("Invalid type !")

    orig_shape = x.shape
    n = x.size
    if n == 0:
        return x
    itemsize = jnp.dtype(x.dtype).itemsize

    flat = jnp.reshape(x, (-1,))  # free (contiguous bitcast)
    aligned = (n // _LANE) * _LANE
    tail_len = n - aligned

    if aligned == 0:
        # Fewer than 128 elements total: a kernel launch is pure overhead.
        return jnp.reshape(_elementwise_jnp(flat, act_type), orig_shape)

    # 128-aligned prefix goes through the Pallas kernel (the common, fully
    # aligned case has tail_len == 0 and therefore zero extra HBM passes).
    main = flat if tail_len == 0 else lax.slice(flat, (0,), (aligned,))
    rows = aligned // _LANE
    x2d = jnp.reshape(main, (rows, _LANE))

    if block_rows is None:
        br = _choose_block_rows(rows, itemsize)
    else:
        sub = _SUBLANE_MULT.get(itemsize, 8)
        br = block_rows if block_rows >= rows else max(sub, (block_rows // sub) * sub)
        br = min(br, rows)

    out2d = _run_kernel_2d(x2d, act_type, br)
    out_flat = jnp.reshape(out2d, (-1,))

    if tail_len:
        # <128-element tail handled with plain jnp (too small for a kernel).
        tail = lax.slice(flat, (aligned,), (n,))
        out_tail = _elementwise_jnp(tail, act_type).astype(out_flat.dtype)
        out_flat = lax.concatenate([out_flat, out_tail], 0)

    return jnp.reshape(out_flat, orig_shape)


def _ref_activation(x, act_type):
    if act_type == "square":
        return x * x
    elif act_type == "log":
        return jnp.log(jnp.maximum(x, 1e-6))
    raise Exception("Invalid type !")


if __name__ == "__main__":
    key = jax.random.PRNGKey(0)

    # Main test: NCHW (2, 4, 16, 16) -> 2048 elems, aligned single-block path.
    x = jax.random.normal(key, (2, 4, 16, 16), dtype=jnp.float32)
    out_sq = jax.block_until_ready(activation(x, "square"))
    out_log = jax.block_until_ready(activation(x, "log"))
    assert out_sq.shape == x.shape and out_sq.dtype == x.dtype
    assert out_log.shape == x.shape and out_log.dtype == x.dtype
    assert jnp.allclose(out_sq, _ref_activation(x, "square"), atol=1e-6, rtol=1e-6)
    assert jnp.allclose(out_log, _ref_activation(x, "log"), atol=1e-5, rtol=1e-5)

    k1, k2, k3 = jax.random.split(key, 3)

    # Multi-block + ragged-last-block path (30 rows, 8-row blocks, grid=4).
    x2 = jax.random.normal(k1, (3, 5, 16, 16), dtype=jnp.float32)
    out2_sq = jax.block_until_ready(activation(x2, "square", block_rows=8))
    out2_log = jax.block_until_ready(activation(x2, "log", block_rows=8))
    assert jnp.allclose(out2_sq, _ref_activation(x2, "square"), atol=1e-6, rtol=1e-6)
    assert jnp.allclose(out2_log, _ref_activation(x2, "log"), atol=1e-5, rtol=1e-5)

    # Non-128-aligned element count (aligned-prefix kernel + jnp tail).
    x3 = jax.random.normal(k2, (2, 3, 5, 7), dtype=jnp.float32)
    out3_log = jax.block_until_ready(activation(x3, "log"))
    assert out3_log.shape == x3.shape
    assert jnp.allclose(out3_log, _ref_activation(x3, "log"), atol=1e-5, rtol=1e-5)

    # Auto block sizing with min-grid split (2 MiB -> 4 pipelined blocks).
    x4 = jax.random.normal(k3, (4, 16, 64, 128), dtype=jnp.float32)
    out4_sq = jax.block_until_ready(activation(x4, "square"))
    out4_log = jax.block_until_ready(activation(x4, "log"))
    assert jnp.allclose(out4_sq, _ref_activation(x4, "square"), atol=1e-6, rtol=1e-6)
    assert jnp.allclose(out4_log, _ref_activation(x4, "log"), atol=1e-5, rtol=1e-5)

    print("KERNEL_OK")
</pallas_src>

<mosaic_0001>
module attributes {stable_mosaic.version = 11 : i64} {
  func.func @_activation_kernel(%arg0: i32, %arg1: memref<16x128xf32, #tpu.memory_space<vmem>>, %arg2: memref<16x128xf32, #tpu.memory_space<vmem>>) attributes {dimension_semantics = [#tpu.dimension_semantics<parallel>], iteration_bounds = array<i64: 1>, scalar_prefetch = 0 : i64, scratch_operands = 0 : i64, tpu.core_type = #tpu.core_type<tc>, window_params = [{transform_indices = @transform_0, window_bounds = array<i64: 16, 128>}, {transform_indices = @transform_1, window_bounds = array<i64: 16, 128>}]} {
    %c0 = arith.constant 0 : index
    %c0_0 = arith.constant 0 : index
    %0 = vector.load %arg1[%c0, %c0_0] : memref<16x128xf32, #tpu.memory_space<vmem>>, vector<16x128xf32>
    %1 = arith.mulf %0, %0 : vector<16x128xf32>
    %c0_1 = arith.constant 0 : index
    %c0_2 = arith.constant 0 : index
    %2 = vector.load %arg2[%c0_1, %c0_2] : memref<16x128xf32, #tpu.memory_space<vmem>>, vector<16x128xf32>
    tpu.vector_store %arg2[%c0_1, %c0_2], %1 {strides = array<i32>} : memref<16x128xf32, #tpu.memory_space<vmem>>, vector<16x128xf32>,
    return
  }
  func.func @transform_0(%arg0: i32) -> (i32, i32) {
    %c0_i32 = arith.constant 0 : i32
    %c0_i32_0 = arith.constant 0 : i32
    return %arg0, %c0_i32 : i32, i32
  }
  func.func @transform_1(%arg0: i32) -> (i32, i32) {
    %c0_i32 = arith.constant 0 : i32
    %c0_i32_0 = arith.constant 0 : i32
    return %arg0, %c0_i32 : i32, i32
  }
}

</mosaic_0001>

<llo_original>
// kernel: tpu_custom_call.1
$region0: #{tpu_custom_call.1}
  #allocation0 [shape = 'u32[]', space=smem, size = 0x4, offset = 0x4, fixed_abs, tag = 'smem constant byte address 0x4 - core index']
  #allocation1 [shape = 'u32[144,128]{1,0:T(1,128)}', space=vmem, size = 0x12000, scoped, tag = 'internal scratch']
  %s0 = inlined_call_operand.hbm [shape: f32[16,128], index: 0, kind: input, shape index: {}]
  %s1 = inlined_call_operand.hbm [shape: f32[16,128], index: 1, kind: output, shape index: {}]
  %s2 = sld [smem:[#allocation0]]
  $region18: #{tpu_custom_call.1} parent=0
    _
  %s4 = ssub.s32 1, %s2
  %s5 = scalar_select 0, %s4, %s2
  $region1: #{tpu_custom_call.1} parent=0
    #allocation2 [shape = 'u8[8192]{0}', space=vmem, size = 0x2000, scoped, tag = 'input window, operand 0, single buffered']
    #allocation3 [shape = 's32[1]{0}', space=sflag, size = 0x4, scoped, tag = 'scoped memory for tpu_custom_call.1']
    #allocation4 [shape = 's32[1]{0}', space=sflag, size = 0x4, scoped, tag = 'scoped memory for tpu_custom_call.1']
    #allocation5 [shape = 'u8[8192]{0}', space=vmem, size = 0x2000, scoped, tag = 'output window, operand 0, single buffered']
    %6 = vsyncpa [#allocation3], 0
    %7 = vsyncpa [#allocation4], 0
    // Predicated region
    $region2: #{tpu_custom_call.1} parent=1 // pred_check
      _
    $region3: #{tpu_custom_call.1} parent=1 // pred_check_branch
      %9 = sbr.rel (0) target = $region5
    $region4: #{tpu_custom_call.1} parent=1 // pred_region
      %s11 = ssub.s32 256, 256
      %12 = vsyncadd [#allocation3], %s11
      %s13 = sshll.u32 [#allocation2], 4
      %s14 = int_to_ptr.vmem [resolvable:$true] %s13
      %19 = dma.hbm_to_vmem [thread:$0]  %s0, 256, %s14, [#allocation3], 128, 128, 8
    $region5: #{tpu_custom_call.1} parent=1 // pred_fallthru
      _
    // Predicated region
    $region6: #{tpu_custom_call.1} parent=1 // pred_check
      _
    $region7: #{tpu_custom_call.1} parent=1 // pred_check_branch
      %21 = sbr.rel (0) target = $region9
    $region8: #{tpu_custom_call.1} parent=1 // pred_region
      %22 = dma.done [#allocation3], 256
    $region9: #{tpu_custom_call.1} parent=1 // pred_fallthru
      _
    %v23 = vld [vmem:[#allocation2] sm:$0xff]
    %v24 = vld [vmem:[#allocation2 + $0x8] sm:$0xff]
    %v25 = vmul.f32 %v23, %v23
    %v26 = vmul.f32 %v24, %v24
    %27 = vst [vmem:[#allocation5] sm:$0xff] %v25
    %28 = vst [vmem:[#allocation5 + $0x8] sm:$0xff] %v26
    // Predicated region
    $region10: #{tpu_custom_call.1} parent=1 // pred_check
      _
    $region11: #{tpu_custom_call.1} parent=1 // pred_check_branch
      %30 = sbr.rel (0) target = $region13
    $region12: #{tpu_custom_call.1} parent=1 // pred_region
      %s32 = ssub.s32 256, 256
      %33 = vsyncadd [#allocation4], %s32
      %s34 = sshll.u32 [#allocation5], 4
      %s35 = int_to_ptr.vmem [resolvable:$true] %s34
      %40 = dma.vmem_to_hbm [thread:$0]  %s35, 256, %s1, [#allocation4], 128, 128, 8
    $region13: #{tpu_custom_call.1} parent=1 // pred_fallthru
      _
    // Predicated region
    $region14: #{tpu_custom_call.1} parent=1 // pred_check
      _
    $region15: #{tpu_custom_call.1} parent=1 // pred_check_branch
      %42 = sbr.rel (0) target = $region17
    $region16: #{tpu_custom_call.1} parent=1 // pred_region
      %43 = dma.done [#allocation4], 256
    $region17: #{tpu_custom_call.1} parent=1 // pred_fallthru
      _
    %44 = vsyncpa [#allocation3], 1
    %45 = vsyncpa [#allocation4], 1

</llo_original>
